<compile_context>
chip_gen: v5e
topology: v5e:2x2
jax: 0.10.0
libtpu: 0.0.40
codegen_flags: <defaults>
</compile_context>

<pallas_src>
import jax
import jax.numpy as jnp
from jax.experimental import pallas as pl
from jax.experimental.pallas import tpu as pltpu


def _round_up(x, m):
    return ((x + m - 1) // m) * m


def _cls_head_kernel(emb_ref, mask_ref, w1_ref, b1_ref, w2_ref, b2_ref,
                     out_ref, num_acc, den_acc):
    # emb_ref : (TB, TS, E) bf16   token-embedding tile
    # mask_ref: (TB, 1, TS) f32    attention-mask tile (1.0 valid / 0.0 pad)
    # w1_ref  : (E, H)  bf16, b1_ref: (1, H)  f32
    # w2_ref  : (H, Cp) bf16, b2_ref: (1, Cp) f32
    # out_ref : (TB, Cp) f32       logits (class dim padded to 128 lanes)
    # num_acc : (TB, 1, E) f32, den_acc: (TB, 1, 1) f32   pooling accumulators
    s = pl.program_id(1)

    @pl.when(s == 0)
    def _init():
        num_acc[...] = jnp.zeros_like(num_acc)
        den_acc[...] = jnp.zeros_like(den_acc)

    emb = emb_ref[...]                              # (TB, TS, E) bf16
    m = mask_ref[...]                               # (TB, 1, TS) f32

    # Masked sum over this sequence tile as an MXU batched contraction
    # ((1 x TS) @ (TS x E) per batch row), accumulated in f32.
    num_acc[...] += jnp.einsum(
        "bqs,bse->bqe", m.astype(emb.dtype), emb,
        preferred_element_type=jnp.float32)
    den_acc[...] += jnp.sum(m, axis=2, keepdims=True)

    @pl.when(s == pl.num_programs(1) - 1)
    def _finalize():
        den = jnp.maximum(den_acc[...], 1.0)        # guard fully-padded rows
        inv = pl.reciprocal(den, approx=True)       # EUP slot, ~free
        # (TB,1,E) -> (TB,E): reduce over the unit axis (cheap squeeze).
        text_vec = jnp.sum(num_acc[...] * inv, axis=1)        # (TB, E) f32

        # hidden_vec = relu(cls_layer1(text_vec))  -- bf16 MXU, f32 accumulate
        h = jnp.dot(text_vec.astype(jnp.bfloat16), w1_ref[...],
                    preferred_element_type=jnp.float32)
        h = jnp.maximum(h + b1_ref[...], 0.0)                 # (TB, H) f32

        # y_hat = cls_layer2(hidden_vec)
        y = jnp.dot(h.astype(jnp.bfloat16), w2_ref[...],
                    preferred_element_type=jnp.float32)
        out_ref[...] = y + b2_ref[...]                        # (TB, Cp) f32


def model_forward(sentence, mask, emb_table, w1, b1, w2, b2):
    """sentence [B,S] int32, mask [B,S] -> logits [B, class_num] (f32)."""
    B, S = sentence.shape
    E = emb_table.shape[1]
    H = w1.shape[1]
    C = w2.shape[1]

    # ---------------- tile sizing (VMEM-budget aware, layout-legal) ----------
    TB = min(128, _round_up(B, 8))                  # batch rows per grid step
    Bp = _round_up(B, TB)

    emb_bytes = 2                                   # bf16
    budget = 16 * 1024 * 1024                       # double-buffered emb tile
    S8 = _round_up(S, 8)
    if 2 * TB * S8 * E * emb_bytes <= budget:
        TS = S8                                     # single seq tile (==full)
    else:
        ts_cap = budget // (2 * TB * E * emb_bytes)
        TS = max(128, min(512, (ts_cap // 128) * 128))   # lane-legal 128 mult
    Sp = _round_up(S, TS)

    Cp = _round_up(C, 128)                          # lane-dense logits

    # ---------------- pad / cast inputs (glue stays in plain JAX) ------------
    sent_p = jnp.zeros((Bp, Sp), jnp.int32).at[:B, :S].set(sentence)
    mask_p = jnp.zeros((Bp, Sp), jnp.float32).at[:B, :S].set(
        mask.astype(jnp.float32))
    mask3 = mask_p[:, None, :]                      # (Bp, 1, Sp)

    # bf16 embedding gather: halves HBM bytes on the dominant stream.
    # TODO(synk): could be fused in-kernel via scalar-prefetch + pl.Element
    # row gather to remove the intermediate (B,S,E) array entirely.
    emb = jnp.take(emb_table.astype(jnp.bfloat16), sent_p, axis=0)  # (Bp,Sp,E)

    w1b = w1.astype(jnp.bfloat16)
    b1r = jnp.reshape(b1, (1, H)).astype(jnp.float32)
    w2p = jnp.zeros((H, Cp), jnp.bfloat16).at[:, :C].set(
        w2.astype(jnp.bfloat16))
    b2p = jnp.zeros((1, Cp), jnp.float32).at[:, :C].set(
        jnp.reshape(b2, (1, C)).astype(jnp.float32))

    grid = (Bp // TB, Sp // TS)

    out = pl.pallas_call(
        _cls_head_kernel,
        out_shape=jax.ShapeDtypeStruct((Bp, Cp), jnp.float32),
        grid_spec=pltpu.PrefetchScalarGridSpec(
            num_scalar_prefetch=0,
            grid=grid,
            in_specs=[
                pl.BlockSpec((TB, TS, E), lambda b, s: (b, s, 0)),   # emb
                pl.BlockSpec((TB, 1, TS), lambda b, s: (b, 0, s)),   # mask
                pl.BlockSpec((E, H), lambda b, s: (0, 0)),           # w1 (res)
                pl.BlockSpec((1, H), lambda b, s: (0, 0)),           # b1
                pl.BlockSpec((H, Cp), lambda b, s: (0, 0)),          # w2 (res)
                pl.BlockSpec((1, Cp), lambda b, s: (0, 0)),          # b2
            ],
            out_specs=pl.BlockSpec((TB, Cp), lambda b, s: (b, 0)),
            scratch_shapes=[
                pltpu.VMEM((TB, 1, E), jnp.float32),   # pooled numerator
                pltpu.VMEM((TB, 1, 1), jnp.float32),   # pooled denominator
            ],
        ),
        compiler_params=pltpu.CompilerParams(
            dimension_semantics=("parallel", "arbitrary"),
            vmem_limit_bytes=48 * 1024 * 1024,
        ),
    )(emb, mask3, w1b, b1r, w2p, b2p)

    return out[:B, :C]


def _xavier_normal(key, fan_in, fan_out):
    # matches nn.init.xavier_normal_ std = sqrt(2 / (fan_in + fan_out))
    std = (2.0 / (fan_in + fan_out)) ** 0.5
    return std * jax.random.normal(key, (fan_in, fan_out), dtype=jnp.float32)


if __name__ == "__main__":
    # small shapes consistent with the forward pass
    B, S = 2, 8          # batch, sequence length
    V = 64               # toy vocab for the stand-in encoder
    E = 32               # opt.embedding_dim
    H = 1024             # fixed by cls_layer1
    C = 4                # opt.class_num

    key = jax.random.PRNGKey(0)
    k_emb, k_w1, k_w2, k_tok = jax.random.split(key, 4)

    emb_table = 0.1 * jax.random.normal(k_emb, (V, E), dtype=jnp.float32)
    w1 = _xavier_normal(k_w1, E, H)          # cls_layer1 weight (in, out)
    b1 = jnp.zeros((1, H), dtype=jnp.float32)
    w2 = _xavier_normal(k_w2, H, C)          # cls_layer2 weight (in, out)
    b2 = jnp.zeros((1, C), dtype=jnp.float32)

    sentence = jax.random.randint(k_tok, (B, S), 0, V, dtype=jnp.int32)
    # mask: first row full, second row has 2 padding positions
    mask = jnp.array([[1, 1, 1, 1, 1, 1, 1, 1],
                      [1, 1, 1, 1, 1, 1, 0, 0]], dtype=jnp.float32)

    y_hat = model_forward(sentence, mask, emb_table, w1, b1, w2, b2)
    y_hat = jax.block_until_ready(y_hat)

    # pure-JAX reference with the same bf16 rounding points as the kernel
    emb_f = jnp.take(emb_table.astype(jnp.bfloat16), sentence,
                     axis=0).astype(jnp.float32)
    den = jnp.maximum(jnp.sum(mask, axis=1, keepdims=True), 1.0)
    pooled = jnp.sum(emb_f * mask[:, :, None], axis=1) / den
    h_ref = jnp.maximum(
        jnp.dot(pooled.astype(jnp.bfloat16), w1.astype(jnp.bfloat16),
                preferred_element_type=jnp.float32) + b1, 0.0)
    ref = jnp.dot(h_ref.astype(jnp.bfloat16), w2.astype(jnp.bfloat16),
                  preferred_element_type=jnp.float32) + b2

    assert y_hat.shape == (B, C)
    assert jnp.allclose(y_hat, ref, atol=2e-3, rtol=5e-2), (
        float(jnp.max(jnp.abs(y_hat - ref))))

    print("KERNEL_OK")
</pallas_src>

<mosaic_0001>
module attributes {stable_mosaic.version = 11 : i64} {
  func.func @_cls_head_kernel(%arg0: i32, %arg1: i32, %arg2: memref<8x8x32xbf16, #tpu.memory_space<vmem>>, %arg3: memref<8x1x8xf32, #tpu.memory_space<vmem>>, %arg4: memref<32x1024xbf16, #tpu.memory_space<vmem>>, %arg5: memref<1x1024xf32, #tpu.memory_space<vmem>>, %arg6: memref<1024x128xbf16, #tpu.memory_space<vmem>>, %arg7: memref<1x128xf32, #tpu.memory_space<vmem>>, %arg8: memref<8x128xf32, #tpu.memory_space<vmem>>, %arg9: memref<8x1x32xf32, #tpu.memory_space<vmem>>, %arg10: memref<8x1x1xf32, #tpu.memory_space<vmem>>) attributes {dimension_semantics = [#tpu.dimension_semantics<parallel>, #tpu.dimension_semantics<arbitrary>], iteration_bounds = array<i64: 1, 1>, scalar_prefetch = 0 : i64, scratch_operands = 2 : i64, tpu.core_type = #tpu.core_type<tc>, window_params = [{transform_indices = @transform_0, window_bounds = array<i64: 8, 8, 32>}, {transform_indices = @transform_1, window_bounds = array<i64: 8, 1, 8>}, {pipeline_mode = #tpu.pipeline_mode<synchronous>, transform_indices = @transform_2, window_bounds = array<i64: 32, 1024>}, {pipeline_mode = #tpu.pipeline_mode<synchronous>, transform_indices = @transform_3, window_bounds = array<i64: 1, 1024>}, {pipeline_mode = #tpu.pipeline_mode<synchronous>, transform_indices = @transform_4, window_bounds = array<i64: 1024, 128>}, {pipeline_mode = #tpu.pipeline_mode<synchronous>, transform_indices = @transform_5, window_bounds = array<i64: 1, 128>}, {transform_indices = @transform_6, window_bounds = array<i64: 8, 128>}]} {
    %c0_i32 = arith.constant 0 : i32
    %0 = arith.cmpi eq, %arg1, %c0_i32 : i32
    %1 = arith.extui %0 : i1 to i32
    %c0_i32_0 = arith.constant 0 : i32
    %2 = arith.cmpi ne, %1, %c0_i32_0 : i32
    scf.if %2 {
      %cst_21 = arith.constant 0.000000e+00 : f32
      %18 = vector.broadcast %cst_21 : f32 to vector<8x1x32xf32>
      %c0_22 = arith.constant 0 : index
      %c0_23 = arith.constant 0 : index
      %c0_24 = arith.constant 0 : index
      %19 = vector.load %arg9[%c0_22, %c0_23, %c0_24] : memref<8x1x32xf32, #tpu.memory_space<vmem>>, vector<8x1x32xf32>
      tpu.vector_store %arg9[%c0_22, %c0_23, %c0_24], %18 {strides = array<i32>} : memref<8x1x32xf32, #tpu.memory_space<vmem>>, vector<8x1x32xf32>,
      %cst_25 = arith.constant 0.000000e+00 : f32
      %20 = vector.broadcast %cst_25 : f32 to vector<8x1x1xf32>
      %c0_26 = arith.constant 0 : index
      %c0_27 = arith.constant 0 : index
      %c0_28 = arith.constant 0 : index
      %21 = vector.load %arg10[%c0_26, %c0_27, %c0_28] : memref<8x1x1xf32, #tpu.memory_space<vmem>>, vector<8x1x1xf32>
      tpu.vector_store %arg10[%c0_26, %c0_27, %c0_28], %20 {strides = array<i32>} : memref<8x1x1xf32, #tpu.memory_space<vmem>>, vector<8x1x1xf32>,
    } else {
    }
    %c0 = arith.constant 0 : index
    %c0_1 = arith.constant 0 : index
    %c0_2 = arith.constant 0 : index
    %3 = vector.load %arg2[%c0, %c0_1, %c0_2] : memref<8x8x32xbf16, #tpu.memory_space<vmem>>, vector<8x8x32xbf16>
    %c0_3 = arith.constant 0 : index
    %c0_4 = arith.constant 0 : index
    %c0_5 = arith.constant 0 : index
    %4 = vector.load %arg3[%c0_3, %c0_4, %c0_5] : memref<8x1x8xf32, #tpu.memory_space<vmem>>, vector<8x1x8xf32>
    %c0_6 = arith.constant 0 : index
    %c0_7 = arith.constant 0 : index
    %c0_8 = arith.constant 0 : index
    %5 = vector.load %arg9[%c0_6, %c0_7, %c0_8] : memref<8x1x32xf32, #tpu.memory_space<vmem>>, vector<8x1x32xf32>
    %6 = arith.truncf %4 : vector<8x1x8xf32> to vector<8x1x8xbf16>
    "tpu.trace_start"() <{level = 10 : i32, message = "bqs,bse->bqe"}> : () -> ()
    %cst = arith.constant dense<0.000000e+00> : vector<8x1x32xf32>
    %7 = tpu.matmul %6, %3, %cst {dimension_numbers = #tpu.dot_dimension_numbers<[2], [1], [1], [2], [0, 0, 0, 1, 1, 2], [0], [0]>} : vector<8x1x8xbf16>, vector<8x8x32xbf16>, vector<8x1x32xf32> -> vector<8x1x32xf32>
    "tpu.trace_stop"() : () -> ()
    %8 = arith.addf %5, %7 : vector<8x1x32xf32>
    %c0_9 = arith.constant 0 : index
    %c0_10 = arith.constant 0 : index
    %c0_11 = arith.constant 0 : index
    %9 = vector.load %arg9[%c0_9, %c0_10, %c0_11] : memref<8x1x32xf32, #tpu.memory_space<vmem>>, vector<8x1x32xf32>
    tpu.vector_store %arg9[%c0_9, %c0_10, %c0_11], %8 {strides = array<i32>} : memref<8x1x32xf32, #tpu.memory_space<vmem>>, vector<8x1x32xf32>,
    %c0_12 = arith.constant 0 : index
    %c0_13 = arith.constant 0 : index
    %c0_14 = arith.constant 0 : index
    %10 = vector.load %arg10[%c0_12, %c0_13, %c0_14] : memref<8x1x1xf32, #tpu.memory_space<vmem>>, vector<8x1x1xf32>
    %cst_15 = arith.constant dense<0.000000e+00> : vector<8x1xf32>
    %11 = vector.multi_reduction <add>, %4, %cst_15 [2] : vector<8x1x8xf32> to vector<8x1xf32>
    %12 = vector.shape_cast %11 : vector<8x1xf32> to vector<8x1x1xf32>
    %13 = arith.addf %10, %12 : vector<8x1x1xf32>
    %c0_16 = arith.constant 0 : index
    %c0_17 = arith.constant 0 : index
    %c0_18 = arith.constant 0 : index
    %14 = vector.load %arg10[%c0_16, %c0_17, %c0_18] : memref<8x1x1xf32, #tpu.memory_space<vmem>>, vector<8x1x1xf32>
    tpu.vector_store %arg10[%c0_16, %c0_17, %c0_18], %13 {strides = array<i32>} : memref<8x1x1xf32, #tpu.memory_space<vmem>>, vector<8x1x1xf32>,
    %c0_i32_19 = arith.constant 0 : i32
    %15 = arith.cmpi eq, %arg1, %c0_i32_19 : i32
    %16 = arith.extui %15 : i1 to i32
    %c0_i32_20 = arith.constant 0 : i32
    %17 = arith.cmpi ne, %16, %c0_i32_20 : i32
    scf.if %17 {
      %c0_21 = arith.constant 0 : index
      %c0_22 = arith.constant 0 : index
      %c0_23 = arith.constant 0 : index
      %18 = vector.load %arg10[%c0_21, %c0_22, %c0_23] : memref<8x1x1xf32, #tpu.memory_space<vmem>>, vector<8x1x1xf32>
      %cst_24 = arith.constant 1.000000e+00 : f32
      %19 = vector.broadcast %cst_24 : f32 to vector<8x1x1xf32>
      %20 = arith.maximumf %18, %19 : vector<8x1x1xf32>
      %21 = tpu.reciprocal %20 {approx = true} : vector<8x1x1xf32> -> vector<8x1x1xf32>
      %c0_25 = arith.constant 0 : index
      %c0_26 = arith.constant 0 : index
      %c0_27 = arith.constant 0 : index
      %22 = vector.load %arg9[%c0_25, %c0_26, %c0_27] : memref<8x1x32xf32, #tpu.memory_space<vmem>>, vector<8x1x32xf32>
      %23 = vector.broadcast %21 : vector<8x1x1xf32> to vector<8x1x32xf32>
      %24 = arith.mulf %22, %23 : vector<8x1x32xf32>
      %cst_28 = arith.constant dense<0.000000e+00> : vector<8x32xf32>
      %25 = vector.multi_reduction <add>, %24, %cst_28 [1] : vector<8x1x32xf32> to vector<8x32xf32>
      %26 = arith.truncf %25 : vector<8x32xf32> to vector<8x32xbf16>
      %c0_29 = arith.constant 0 : index
      %c0_30 = arith.constant 0 : index
      %27 = vector.load %arg4[%c0_29, %c0_30] : memref<32x1024xbf16, #tpu.memory_space<vmem>>, vector<32x1024xbf16>
      %cst_31 = arith.constant dense<0.000000e+00> : vector<8x1024xf32>
      %28 = tpu.matmul %26, %27, %cst_31 {dimension_numbers = #tpu.dot_dimension_numbers<[1], [0], [0], [1], [0, 0, 1, 1], [], []>} : vector<8x32xbf16>, vector<32x1024xbf16>, vector<8x1024xf32> -> vector<8x1024xf32>
      %c0_32 = arith.constant 0 : index
      %c0_33 = arith.constant 0 : index
      %29 = vector.load %arg5[%c0_32, %c0_33] : memref<1x1024xf32, #tpu.memory_space<vmem>>, vector<1x1024xf32>
      %30 = vector.broadcast %29 : vector<1x1024xf32> to vector<8x1024xf32>
      %31 = arith.addf %28, %30 : vector<8x1024xf32>
      %cst_34 = arith.constant 0.000000e+00 : f32
      %32 = vector.broadcast %cst_34 : f32 to vector<8x1024xf32>
      %33 = arith.maximumf %31, %32 : vector<8x1024xf32>
      %34 = arith.truncf %33 : vector<8x1024xf32> to vector<8x1024xbf16>
      %c0_35 = arith.constant 0 : index
      %c0_36 = arith.constant 0 : index
      %35 = vector.load %arg6[%c0_35, %c0_36] : memref<1024x128xbf16, #tpu.memory_space<vmem>>, vector<1024x128xbf16>
      %cst_37 = arith.constant dense<0.000000e+00> : vector<8x128xf32>
      %36 = tpu.matmul %34, %35, %cst_37 {dimension_numbers = #tpu.dot_dimension_numbers<[1], [0], [0], [1], [0, 0, 1, 1], [], []>} : vector<8x1024xbf16>, vector<1024x128xbf16>, vector<8x128xf32> -> vector<8x128xf32>
      %c0_38 = arith.constant 0 : index
      %c0_39 = arith.constant 0 : index
      %37 = vector.load %arg7[%c0_38, %c0_39] : memref<1x128xf32, #tpu.memory_space<vmem>>, vector<1x128xf32>
      %38 = vector.broadcast %37 : vector<1x128xf32> to vector<8x128xf32>
      %39 = arith.addf %36, %38 : vector<8x128xf32>
      %c0_40 = arith.constant 0 : index
      %c0_41 = arith.constant 0 : index
      %40 = vector.load %arg8[%c0_40, %c0_41] : memref<8x128xf32, #tpu.memory_space<vmem>>, vector<8x128xf32>
      tpu.vector_store %arg8[%c0_40, %c0_41], %39 {strides = array<i32>} : memref<8x128xf32, #tpu.memory_space<vmem>>, vector<8x128xf32>,
    } else {
    }
    return
  }
  func.func @transform_0(%arg0: i32, %arg1: i32) -> (i32, i32, i32) {
    %c0_i32 = arith.constant 0 : i32
    %c0_i32_0 = arith.constant 0 : i32
    return %arg0, %arg1, %c0_i32 : i32, i32, i32
  }
  func.func @transform_1(%arg0: i32, %arg1: i32) -> (i32, i32, i32) {
    %c0_i32 = arith.constant 0 : i32
    %c0_i32_0 = arith.constant 0 : i32
    return %arg0, %c0_i32, %arg1 : i32, i32, i32
  }
  func.func @transform_2(%arg0: i32, %arg1: i32) -> (i32, i32) {
    %c0_i32 = arith.constant 0 : i32
    %c0_i32_0 = arith.constant 0 : i32
    %c0_i32_1 = arith.constant 0 : i32
    return %c0_i32, %c0_i32_0 : i32, i32
  }
  func.func @transform_3(%arg0: i32, %arg1: i32) -> (i32, i32) {
    %c0_i32 = arith.constant 0 : i32
    %c0_i32_0 = arith.constant 0 : i32
    %c0_i32_1 = arith.constant 0 : i32
    return %c0_i32, %c0_i32_0 : i32, i32
  }
  func.func @transform_4(%arg0: i32, %arg1: i32) -> (i32, i32) {
    %c0_i32 = arith.constant 0 : i32
    %c0_i32_0 = arith.constant 0 : i32
    %c0_i32_1 = arith.constant 0 : i32
    return %c0_i32, %c0_i32_0 : i32, i32
  }
  func.func @transform_5(%arg0: i32, %arg1: i32) -> (i32, i32) {
    %c0_i32 = arith.constant 0 : i32
    %c0_i32_0 = arith.constant 0 : i32
    %c0_i32_1 = arith.constant 0 : i32
    return %c0_i32, %c0_i32_0 : i32, i32
  }
  func.func @transform_6(%arg0: i32, %arg1: i32) -> (i32, i32) {
    %c0_i32 = arith.constant 0 : i32
    %c0_i32_0 = arith.constant 0 : i32
    return %arg0, %c0_i32 : i32, i32
  }
}

</mosaic_0001>

<llo_original>
// kernel: tpu_custom_call.1
$region0: #{tpu_custom_call.1}
  #allocation0 [shape = 'u32[]', space=smem, size = 0x4, offset = 0x4, fixed_abs, tag = 'smem constant byte address 0x4 - core index']
  #allocation1 [shape = 'u32[72,128]{1,0:T(1,128)}', space=vmem, size = 0x9000, scoped, tag = 'internal scratch']
  #allocation2 [shape = 'f32[8,1,32]{2,1,0:T(1,128)}', space=vmem, size = 0x1000, scoped, tag = 'scratch operand']
  #allocation3 [shape = 'f32[8,1,1]{2,1,0:T(1,128)}', space=vmem, size = 0x1000, scoped, tag = 'scratch operand']
  %s0 = inlined_call_operand.hbm [shape: bf16[8,8,32], index: 0, kind: input, shape index: {}]
  %s1 = inlined_call_operand.hbm [shape: f32[8,1,8], index: 1, kind: input, shape index: {}]
  %s2 = inlined_call_operand.hbm [shape: bf16[32,1024], index: 2, kind: input, shape index: {}]
  %s3 = inlined_call_operand.hbm [shape: f32[1,1024], index: 3, kind: input, shape index: {}]
  %s4 = inlined_call_operand.hbm [shape: bf16[1024,128], index: 4, kind: input, shape index: {}]
  %s5 = inlined_call_operand.vmem [shape: f32[1,128], index: 5, kind: input, shape index: {}]
  %s6 = inlined_call_operand.hbm [shape: f32[8,128], index: 6, kind: output, shape index: {}]
  %s7 = sld [smem:[#allocation0]]
  $region62: #{tpu_custom_call.1} parent=0
    _
  %s9 = ssub.s32 1, %s7
  %s10 = scalar_select 0, %s9, %s7
  $region1: #{tpu_custom_call.1} parent=0
    #allocation4 [shape = 'u8[16384]{0}', space=vmem, size = 0x4000, scoped, tag = 'input window, operand 0, single buffered']
    #allocation5 [shape = 's32[1]{0}', space=sflag, size = 0x4, scoped, tag = 'scoped memory for tpu_custom_call.1']
    #allocation6 [shape = 's32[1]{0}', space=sflag, size = 0x4, scoped, tag = 'scoped memory for tpu_custom_call.1']
    #allocation7 [shape = 'u8[4096]{0}', space=vmem, size = 0x1000, scoped, tag = 'input window, operand 1, single buffered']
    #allocation8 [shape = 's32[1]{0}', space=sflag, size = 0x4, scoped, tag = 'scoped memory for tpu_custom_call.1']
    #allocation9 [shape = 'u8[65536]{0}', space=vmem, size = 0x10000, scoped, tag = 'input window, operand 2, single buffered']
    #allocation10 [shape = 'u8[4096]{0}', space=vmem, size = 0x1000, scoped, tag = 'input window, operand 3, single buffered']
    #allocation11 [shape = 's32[1]{0}', space=sflag, size = 0x4, scoped, tag = 'scoped memory for tpu_custom_call.1']
    #allocation12 [shape = 'u8[262144]{0}', space=vmem, size = 0x40000, scoped, tag = 'input window, operand 4, single buffered']
    #allocation13 [shape = 'u8[4096]{0}', space=vmem, size = 0x1000, scoped, tag = 'output window, operand 0, single buffered']
    %11 = vsyncpa [#allocation5], 0
    %12 = vsyncpa [#allocation8], 0
    %13 = vsyncpa [#allocation11], 0
    %14 = vsyncpa [#allocation6], 0
    // Predicated region
    $region2: #{tpu_custom_call.1} parent=1 // pred_check
      _
    $region3: #{tpu_custom_call.1} parent=1 // pred_check_branch
      %16 = sbr.rel (0) target = $region5
    $region4: #{tpu_custom_call.1} parent=1 // pred_region
      %18 = vsyncadd [#allocation5], 0
      %s19 = sshll.u32 %s0, 4
      %s20 = int_to_ptr.hbm [resolvable:$true] %s19
      %s21 = sshll.u32 [#allocation4], 4
      %s22 = int_to_ptr.vmem [resolvable:$true] %s21
      %27 = dma.hbm_to_vmem [thread:$0]  %s20, 512, %s22, [#allocation5], 64, 64, 4
    $region5: #{tpu_custom_call.1} parent=1 // pred_fallthru
      _
    // Predicated region
    $region6: #{tpu_custom_call.1} parent=1 // pred_check
      _
    $region7: #{tpu_custom_call.1} parent=1 // pred_check_branch
      %29 = sbr.rel (0) target = $region9
    $region8: #{tpu_custom_call.1} parent=1 // pred_region
      %31 = vsyncadd [#allocation8], 0
      %s32 = sshll.u32 %s1, 4
      %s33 = int_to_ptr.hbm [resolvable:$true] %s32
      %s34 = sshll.u32 [#allocation7], 4
      %s35 = int_to_ptr.vmem [resolvable:$true] %s34
      %40 = dma.hbm_to_vmem [thread:$0]  %s33, 128, %s35, [#allocation8], 16, 16, 1
    $region9: #{tpu_custom_call.1} parent=1 // pred_fallthru
      _
    // Predicated region
    $region10: #{tpu_custom_call.1} parent=1 // pred_check
      _
    $region11: #{tpu_custom_call.1} parent=1 // pred_check_branch
      %42 = sbr.rel (0) target = $region13
    $region12: #{tpu_custom_call.1} parent=1 // pred_region
      %44 = vsyncadd [#allocation8], 0
      %s45 = sshll.u32 %s2, 4
      %s46 = int_to_ptr.hbm [resolvable:$true] %s45
      %s47 = sshll.u32 [#allocation9], 4
      %s48 = int_to_ptr.vmem [resolvable:$true] %s47
      %53 = dma.hbm_to_vmem [thread:$0]  %s46, 2048, %s48, [#allocation8], 512, 512, 32
    $region13: #{tpu_custom_call.1} parent=1 // pred_fallthru
      _
    // Predicated region
    $region14: #{tpu_custom_call.1} parent=1 // pred_check
      _
    $region15: #{tpu_custom_call.1} parent=1 // pred_check_branch
      %55 = sbr.rel (0) target = $region17
    $region16: #{tpu_custom_call.1} parent=1 // pred_region
      %57 = vsyncadd [#allocation11], 0
      %s59 = sshll.u32 %s3, 4
      %s60 = int_to_ptr.hbm [resolvable:$true] %s59
      %s61 = sshll.u32 [#allocation10], 4
      %s62 = int_to_ptr.vmem [resolvable:$true] %s61
      %64 = dma.hbm_to_vmem [thread:$0]  %s60, 128, %s62, [#allocation11]
    $region17: #{tpu_custom_call.1} parent=1 // pred_fallthru
      _
    // Predicated region
    $region18: #{tpu_custom_call.1} parent=1 // pred_check
      _
    $region19: #{tpu_custom_call.1} parent=1 // pred_check_branch
      %66 = sbr.rel (0) target = $region21
    $region20: #{tpu_custom_call.1} parent=1 // pred_region
      %68 = vsyncadd [#allocation11], 0
      %s69 = sshll.u32 %s4, 4
      %s70 = int_to_ptr.hbm [resolvable:$true] %s69
      %s71 = sshll.u32 [#allocation12], 4
      %s72 = int_to_ptr.vmem [resolvable:$true] %s71
      %77 = dma.hbm_to_vmem [thread:$0]  %s70, 8192, %s72, [#allocation11], 64, 64, 4
    $region21: #{tpu_custom_call.1} parent=1 // pred_fallthru
      _
    // Predicated region
    $region22: #{tpu_custom_call.1} parent=1 // pred_check
      _
    $region23: #{tpu_custom_call.1} parent=1 // pred_check_branch
      %79 = sbr.rel (0) target = $region25
    $region24: #{tpu_custom_call.1} parent=1 // pred_region
      _
    $region25: #{tpu_custom_call.1} parent=1 // pred_fallthru
      _
    // Predicated region
    $region26: #{tpu_custom_call.1} parent=1 // pred_check
      _
    $region27: #{tpu_custom_call.1} parent=1 // pred_check_branch
      %81 = sbr.rel (0) target = $region29
    $region28: #{tpu_custom_call.1} parent=1 // pred_region
      %83 = dma.done [#allocation5], 512
    $region29: #{tpu_custom_call.1} parent=1 // pred_fallthru
      _
    // Predicated region
    $region30: #{tpu_custom_call.1} parent=1 // pred_check
      _
    $region31: #{tpu_custom_call.1} parent=1 // pred_check_branch
      %85 = sbr.rel (0) target = $region33
    $region32: #{tpu_custom_call.1} parent=1 // pred_region
      %87 = dma.done [#allocation8], 128
    $region33: #{tpu_custom_call.1} parent=1 // pred_fallthru
      _
    // Predicated region
    $region34: #{tpu_custom_call.1} parent=1 // pred_check
      _
    $region35: #{tpu_custom_call.1} parent=1 // pred_check_branch
      %89 = sbr.rel (0) target = $region37
    $region36: #{tpu_custom_call.1} parent=1 // pred_region
      %91 = dma.done [#allocation8], 2048
    $region37: #{tpu_custom_call.1} parent=1 // pred_fallthru
      _
    // Predicated region
    $region38: #{tpu_custom_call.1} parent=1 // pred_check
      _
    $region39: #{tpu_custom_call.1} parent=1 // pred_check_branch
      %93 = sbr.rel (0) target = $region41
    $region40: #{tpu_custom_call.1} parent=1 // pred_region
      %95 = dma.done [#allocation11], 128
    $region41: #{tpu_custom_call.1} parent=1 // pred_fallthru
      _
    // Predicated region
    $region42: #{tpu_custom_call.1} parent=1 // pred_check
      _
    $region43: #{tpu_custom_call.1} parent=1 // pred_check_branch
      %97 = sbr.rel (0) target = $region45
    $region44: #{tpu_custom_call.1} parent=1 // pred_region
      %99 = dma.done [#allocation11], 8192
    $region45: #{tpu_custom_call.1} parent=1 // pred_fallthru
      _
    %p101 = scmp.eq.s32.totalorder 0, 0
    // Predicated region
    $region46: #{tpu_custom_call.1} parent=1 // pred_check
      %p102 = pneg %p101
    $region47: #{tpu_custom_call.1} parent=1 // pred_check_branch
      %104 = sbr.rel (%p102) target = $region49
    $region48: #{tpu_custom_call.1} parent=1 // pred_region
      %vm105 = vcmask 253952
      %106 = vst.msk [vmem:[#allocation2] sm:$0x1] %vm105, 0.0
      %107 = vst.msk [vmem:[#allocation2 + $0x1] sm:$0x1] %vm105, 0.0
      %108 = vst.msk [vmem:[#allocation2 + $0x2] sm:$0x1] %vm105, 0.0
      %109 = vst.msk [vmem:[#allocation2 + $0x3] sm:$0x1] %vm105, 0.0
      %110 = vst.msk [vmem:[#allocation2 + $0x4] sm:$0x1] %vm105, 0.0
      %111 = vst.msk [vmem:[#allocation2 + $0x5] sm:$0x1] %vm105, 0.0
      %112 = vst.msk [vmem:[#allocation2 + $0x6] sm:$0x1] %vm105, 0.0
      %113 = vst.msk [vmem:[#allocation2 + $0x7] sm:$0x1] %vm105, 0.0
      %vm114 = vcmask 0
      %115 = vst.msk [vmem:[#allocation3] sm:$0x1] %vm114, 0.0
      %116 = vst.msk [vmem:[#allocation3 + $0x1] sm:$0x1] %vm114, 0.0
      %117 = vst.msk [vmem:[#allocation3 + $0x2] sm:$0x1] %vm114, 0.0
      %118 = vst.msk [vmem:[#allocation3 + $0x3] sm:$0x1] %vm114, 0.0
      %119 = vst.msk [vmem:[#allocation3 + $0x4] sm:$0x1] %vm114, 0.0
      %120 = vst.msk [vmem:[#allocation3 + $0x5] sm:$0x1] %vm114, 0.0
      %121 = vst.msk [vmem:[#allocation3 + $0x6] sm:$0x1] %vm114, 0.0
      %122 = vst.msk [vmem:[#allocation3 + $0x7] sm:$0x1] %vm114, 0.0
    $region49: #{tpu_custom_call.1} parent=1 // pred_fallthru
      _
    %v123 = vld [vmem:[#allocation4] sm:$0xf]
    %v124 = vld [vmem:[#allocation4 + $0x4] sm:$0xf]
    %v125 = vld [vmem:[#allocation4 + $0x8] sm:$0xf]
    %v126 = vld [vmem:[#allocation4 + $0xc] sm:$0xf]
    %v127 = vld [vmem:[#allocation4 + $0x10] sm:$0xf]
    %v128 = vld [vmem:[#allocation4 + $0x14] sm:$0xf]
    %v129 = vld [vmem:[#allocation4 + $0x18] sm:$0xf]
    %v130 = vld [vmem:[#allocation4 + $0x1c] sm:$0xf]
    %v131 = vld [vmem:[#allocation7] sm:$0x1]
    %v132 = vld [vmem:[#allocation7 + $0x1] sm:$0x1]
    %v133 = vld [vmem:[#allocation7 + $0x2] sm:$0x1]
    %v134 = vld [vmem:[#allocation7 + $0x3] sm:$0x1]
    %v135 = vld [vmem:[#allocation7 + $0x4] sm:$0x1]
    %v136 = vld [vmem:[#allocation7 + $0x5] sm:$0x1]
    %v137 = vld [vmem:[#allocation7 + $0x6] sm:$0x1]
    %v138 = vld [vmem:[#allocation7 + $0x7] sm:$0x1]
    %v139 = vld [vmem:[#allocation2] sm:$0x1]
    %v140 = vld [vmem:[#allocation2 + $0x1] sm:$0x1]
    %v141 = vld [vmem:[#allocation2 + $0x2] sm:$0x1]
    %v142 = vld [vmem:[#allocation2 + $0x3] sm:$0x1]
    %v143 = vld [vmem:[#allocation2 + $0x4] sm:$0x1]
    %v144 = vld [vmem:[#allocation2 + $0x5] sm:$0x1]
    %v145 = vld [vmem:[#allocation2 + $0x6] sm:$0x1]
    %v146 = vld [vmem:[#allocation2 + $0x7] sm:$0x1]
    %v147 = vpack.c.bf16 %v131, %v131
    %v148 = vpack.c.bf16 %v132, %v132
    %v149 = vpack.c.bf16 %v133, %v133
    %v150 = vpack.c.bf16 %v134, %v134
    %v151 = vpack.c.bf16 %v135, %v135
    %v152 = vpack.c.bf16 %v136, %v136
    %v153 = vpack.c.bf16 %v137, %v137
    %v154 = vpack.c.bf16 %v138, %v138
    %vm155 = vcmask 64512
    %v157 = vsel %vm155, %v147, 0
    %vm159 = vcmask 1043456
    %v161 = vsel %vm159, %v123, 0
    %163 = vmatpush.bf16.msra.mxu0 0
    %164 = vmatpush.bf16.msra.mxu0 0
    %165 = vmatpush.bf16.msra.mxu0 0
    %166 = vmatpush.bf16.msra.mxu0 0
    %167 = vmatpush.bf16.msra.mxu0 0
    %168 = vmatpush.bf16.msra.mxu0 0
    %169 = vmatpush.bf16.msra.mxu0 0
    %170 = vmatpush.bf16.msra.mxu0 %v161
    %171 = vmatmul.bf16.gmra.mxu0 %v157
    %v172 = vpop.f32.mrf.mxu0
    %v173 = vadd.f32 0.0, %v172
    %v174 = vpop.f32.mrf.mxu0
    %175 = vdwg.mxu0
    %v177 = vsel %vm155, %v148, 0
    %v180 = vsel %vm159, %v124, 0
    %182 = vmatpush.bf16.msra.mxu0 0
    %183 = vmatpush.bf16.msra.mxu0 0
    %184 = vmatpush.bf16.msra.mxu0 0
    %185 = vmatpush.bf16.msra.mxu0 0
    %186 = vmatpush.bf16.msra.mxu0 0
    %187 = vmatpush.bf16.msra.mxu0 0
    %188 = vmatpush.bf16.msra.mxu0 0
    %189 = vmatpush.bf16.msra.mxu0 %v180
    %190 = vmatmul.bf16.gmra.mxu0 %v177
    %v191 = vpop.f32.mrf.mxu0
    %v192 = vadd.f32 0.0, %v191
    %v193 = vpop.f32.mrf.mxu0
    %194 = vdwg.mxu0
    %v196 = vsel %vm155, %v149, 0
    %v199 = vsel %vm159, %v125, 0
    %201 = vmatpush.bf16.msra.mxu0 0
    %202 = vmatpush.bf16.msra.mxu0 0
    %203 = vmatpush.bf16.msra.mxu0 0
    %204 = vmatpush.bf16.msra.mxu0 0
    %205 = vmatpush.bf16.msra.mxu0 0
    %206 = vmatpush.bf16.msra.mxu0 0
    %207 = vmatpush.bf16.msra.mxu0 0
    %208 = vmatpush.bf16.msra.mxu0 %v199
    %209 = vmatmul.bf16.gmra.mxu0 %v196
    %v210 = vpop.f32.mrf.mxu0
    %v211 = vadd.f32 0.0, %v210
    %v212 = vpop.f32.mrf.mxu0
    %213 = vdwg.mxu0
    %v215 = vsel %vm155, %v150, 0
    %v218 = vsel %vm159, %v126, 0
    %220 = vmatpush.bf16.msra.mxu0 0
    %221 = vmatpush.bf16.msra.mxu0 0
    %222 = vmatpush.bf16.msra.mxu0 0
    %223 = vmatpush.bf16.msra.mxu0 0
    %224 = vmatpush.bf16.msra.mxu0 0
    %225 = vmatpush.bf16.msra.mxu0 0
    %226 = vmatpush.bf16.msra.mxu0 0
    %227 = vmatpush.bf16.msra.mxu0 %v218
    %228 = vmatmul.bf16.gmra.mxu0 %v215
    %v229 = vpop.f32.mrf.mxu0
    %v230 = vadd.f32 0.0, %v229
    %v231 = vpop.f32.mrf.mxu0
    %232 = vdwg.mxu0
    %v234 = vsel %vm155, %v151, 0
    %v237 = vsel %vm159, %v127, 0
    %239 = vmatpush.bf16.msra.mxu0 0
    %240 = vmatpush.bf16.msra.mxu0 0
    %241 = vmatpush.bf16.msra.mxu0 0
    %242 = vmatpush.bf16.msra.mxu0 0
    %243 = vmatpush.bf16.msra.mxu0 0
    %244 = vmatpush.bf16.msra.mxu0 0
    %245 = vmatpush.bf16.msra.mxu0 0
    %246 = vmatpush.bf16.msra.mxu0 %v237
    %247 = vmatmul.bf16.gmra.mxu0 %v234
    %v248 = vpop.f32.mrf.mxu0
    %v249 = vadd.f32 0.0, %v248
    %v250 = vpop.f32.mrf.mxu0
    %251 = vdwg.mxu0
    %v253 = vsel %vm155, %v152, 0
    %v256 = vsel %vm159, %v128, 0
    %258 = vmatpush.bf16.msra.mxu0 0
    %259 = vmatpush.bf16.msra.mxu0 0
    %260 = vmatpush.bf16.msra.mxu0 0
    %261 = vmatpush.bf16.msra.mxu0 0
    %262 = vmatpush.bf16.msra.mxu0 0
    %263 = vmatpush.bf16.msra.mxu0 0
    %264 = vmatpush.bf16.msra.mxu0 0
    %265 = vmatpush.bf16.msra.mxu0 %v256
    %266 = vmatmul.bf16.gmra.mxu0 %v253
    %v267 = vpop.f32.mrf.mxu0
    %v268 = vadd.f32 0.0, %v267
    %v269 = vpop.f32.mrf.mxu0
    %270 = vdwg.mxu0
    %v272 = vsel %vm155, %v153, 0
    %v275 = vsel %vm159, %v129, 0
    %277 = vmatpush.bf16.msra.mxu0 0
    %278 = vmatpush.bf16.msra.mxu0 0
    %279 = vmatpush.bf16.msra.mxu0 0
    %280 = vmatpush.bf16.msra.mxu0 0
    %281 = vmatpush.bf16.msra.mxu0 0
    %282 = vmatpush.bf16.msra.mxu0 0
    %283 = vmatpush.bf16.msra.mxu0 0
    %284 = vmatpush.bf16.msra.mxu0 %v275
    %285 = vmatmul.bf16.gmra.mxu0 %v272
    %v286 = vpop.f32.mrf.mxu0
    %v287 = vadd.f32 0.0, %v286
    %v288 = vpop.f32.mrf.mxu0
    %289 = vdwg.mxu0
    %v291 = vsel %vm155, %v154, 0
    %v294 = vsel %vm159, %v130, 0
    %296 = vmatpush.bf16.msra.mxu0 0
    %297 = vmatpush.bf16.msra.mxu0 0
    %298 = vmatpush.bf16.msra.mxu0 0
    %299 = vmatpush.bf16.msra.mxu0 0
    %300 = vmatpush.bf16.msra.mxu0 0
    %301 = vmatpush.bf16.msra.mxu0 0
    %302 = vmatpush.bf16.msra.mxu0 0
    %303 = vmatpush.bf16.msra.mxu0 %v294
    %304 = vmatmul.bf16.gmra.mxu0 %v291
    %v305 = vpop.f32.mrf.mxu0
    %v306 = vadd.f32 0.0, %v305
    %v307 = vpop.f32.mrf.mxu0
    %308 = vdwg.mxu0
    %v309 = vadd.f32 %v139, %v173
    %v310 = vadd.f32 %v140, %v192
    %v311 = vadd.f32 %v141, %v211
    %v312 = vadd.f32 %v142, %v230
    %v313 = vadd.f32 %v143, %v249
    %v314 = vadd.f32 %v144, %v268
    %v315 = vadd.f32 %v145, %v287
    %v316 = vadd.f32 %v146, %v306
    %vm317 = vcmask 253952
    %318 = vst.msk [vmem:[#allocation2] sm:$0x1] %vm317, %v309
    %319 = vst.msk [vmem:[#allocation2 + $0x1] sm:$0x1] %vm317, %v310
    %320 = vst.msk [vmem:[#allocation2 + $0x2] sm:$0x1] %vm317, %v311
    %321 = vst.msk [vmem:[#allocation2 + $0x3] sm:$0x1] %vm317, %v312
    %322 = vst.msk [vmem:[#allocation2 + $0x4] sm:$0x1] %vm317, %v313
    %323 = vst.msk [vmem:[#allocation2 + $0x5] sm:$0x1] %vm317, %v314
    %324 = vst.msk [vmem:[#allocation2 + $0x6] sm:$0x1] %vm317, %v315
    %325 = vst.msk [vmem:[#allocation2 + $0x7] sm:$0x1] %vm317, %v316
    %v326 = vld [vmem:[#allocation3] sm:$0x1]
    %v327 = vld [vmem:[#allocation3 + $0x1] sm:$0x1]
    %v328 = vld [vmem:[#allocation3 + $0x2] sm:$0x1]
    %v329 = vld [vmem:[#allocation3 + $0x3] sm:$0x1]
    %v330 = vld [vmem:[#allocation3 + $0x4] sm:$0x1]
    %v331 = vld [vmem:[#allocation3 + $0x5] sm:$0x1]
    %v332 = vld [vmem:[#allocation3 + $0x6] sm:$0x1]
    %v333 = vld [vmem:[#allocation3 + $0x7] sm:$0x1]
    %vm334 = vcmask 57344
    %v335 = vsel %vm334, %v131, 0.0
    %336 = vadd.xlane.f32.xlu0 %v335
    %v337 = vpop.xlane.xlu0 %336
    %v338 = vsel %vm334, %v132, 0.0
    %339 = vadd.xlane.f32.xlu0 %v338
    %v340 = vpop.xlane.xlu0 %339
    %v341 = vsel %vm334, %v133, 0.0
    %342 = vadd.xlane.f32.xlu0 %v341
    %v343 = vpop.xlane.xlu0 %342
    %v344 = vsel %vm334, %v134, 0.0
    %345 = vadd.xlane.f32.xlu0 %v344
    %v346 = vpop.xlane.xlu0 %345
    %v347 = vsel %vm334, %v135, 0.0
    %348 = vadd.xlane.f32.xlu0 %v347
    %v349 = vpop.xlane.xlu0 %348
    %v350 = vsel %vm334, %v136, 0.0
    %351 = vadd.xlane.f32.xlu0 %v350
    %v352 = vpop.xlane.xlu0 %351
    %v353 = vsel %vm334, %v137, 0.0
    %354 = vadd.xlane.f32.xlu0 %v353
    %v355 = vpop.xlane.xlu0 %354
    %v356 = vsel %vm334, %v138, 0.0
    %357 = vadd.xlane.f32.xlu0 %v356
    %v358 = vpop.xlane.xlu0 %357
    %v359 = vadd.f32 %v326, %v337
    %v360 = vadd.f32 %v327, %v340
    %v361 = vadd.f32 %v328, %v343
    %v362 = vadd.f32 %v329, %v346
    %v363 = vadd.f32 %v330, %v349
    %v364 = vadd.f32 %v331, %v352
    %v365 = vadd.f32 %v332, %v355
    %v366 = vadd.f32 %v333, %v358
    %vm367 = vcmask 0
    %368 = vst.msk [vmem:[#allocation3] sm:$0x1] %vm367, %v359
    %369 = vst.msk [vmem:[#allocation3 + $0x1] sm:$0x1] %vm367, %v360
    %370 = vst.msk [vmem:[#allocation3 + $0x2] sm:$0x1] %vm367, %v361
    %371 = vst.msk [vmem:[#allocation3 + $0x3] sm:$0x1] %vm367, %v362
    %372 = vst.msk [vmem:[#allocation3 + $0x4] sm:$0x1] %vm367, %v363
    %373 = vst.msk [vmem:[#allocation3 + $0x5] sm:$0x1] %vm367, %v364
    %374 = vst.msk [vmem:[#allocation3 + $0x6] sm:$0x1] %vm367, %v365
    %375 = vst.msk [vmem:[#allocation3 + $0x7] sm:$0x1] %vm367, %v366
    // Predicated region
    $region50: #{tpu_custom_call.1} parent=1 // pred_check
      %p376 = pneg %p101
    $region51: #{tpu_custom_call.1} parent=1 // pred_check_branch
      %378 = sbr.rel (%p376) target = $region53
    $region52: #{tpu_custom_call.1} parent=1 // pred_region
      %v379 = vld [vmem:[#allocation3] sm:$0x1]
      %v380 = vld [vmem:[#allocation3 + $0x1] sm:$0x1]
      %v381 = vld [vmem:[#allocation3 + $0x2] sm:$0x1]
      %v382 = vld [vmem:[#allocation3 + $0x3] sm:$0x1]
      %v383 = vld [vmem:[#allocation3 + $0x4] sm:$0x1]
      %v384 = vld [vmem:[#allocation3 + $0x5] sm:$0x1]
      %v385 = vld [vmem:[#allocation3 + $0x6] sm:$0x1]
      %v386 = vld [vmem:[#allocation3 + $0x7] sm:$0x1]
      %v387 = vmax.f32 %v379, 1.0
      %v388 = vmax.f32 %v380, 1.0
      %v389 = vmax.f32 %v381, 1.0
      %v390 = vmax.f32 %v382, 1.0
      %v391 = vmax.f32 %v383, 1.0
      %v392 = vmax.f32 %v384, 1.0
      %v393 = vmax.f32 %v385, 1.0
      %v394 = vmax.f32 %v386, 1.0
      %v395 = vrcp.pop %v387
      %v396 = vrcp.pop %v388
      %v397 = vrcp.pop %v389
      %v398 = vrcp.pop %v390
      %v399 = vrcp.pop %v391
      %v400 = vrcp.pop %v392
      %v401 = vrcp.pop %v393
      %v402 = vrcp.pop %v394
      %v403 = vld [vmem:[#allocation2] sm:$0x1]
      %v404 = vld [vmem:[#allocation2 + $0x1] sm:$0x1]
      %v405 = vld [vmem:[#allocation2 + $0x2] sm:$0x1]
      %v406 = vld [vmem:[#allocation2 + $0x3] sm:$0x1]
      %v407 = vld [vmem:[#allocation2 + $0x4] sm:$0x1]
      %v408 = vld [vmem:[#allocation2 + $0x5] sm:$0x1]
      %v409 = vld [vmem:[#allocation2 + $0x6] sm:$0x1]
      %v410 = vld [vmem:[#allocation2 + $0x7] sm:$0x1]
      %412 = vset.pattern.permute.xlu0 0
      %413 = vperm.xlu0 %412, %v395
      %v414 = vpop.permute.xlu0 %413
      %v416 = vperm.slane %v414, 0
      %418 = vset.pattern.permute.xlu0 0
      %419 = vperm.xlu0 %418, %v396
      %v420 = vpop.permute.xlu0 %419
      %v422 = vperm.slane %v420, 0
      %424 = vset.pattern.permute.xlu0 0
      %425 = vperm.xlu0 %424, %v397
      %v426 = vpop.permute.xlu0 %425
      %v428 = vperm.slane %v426, 0
      %430 = vset.pattern.permute.xlu0 0
      %431 = vperm.xlu0 %430, %v398
      %v432 = vpop.permute.xlu0 %431
      %v434 = vperm.slane %v432, 0
      %436 = vset.pattern.permute.xlu0 0
      %437 = vperm.xlu0 %436, %v399
      %v438 = vpop.permute.xlu0 %437
      %v440 = vperm.slane %v438, 0
      %442 = vset.pattern.permute.xlu0 0
      %443 = vperm.xlu0 %442, %v400
      %v444 = vpop.permute.xlu0 %443
      %v446 = vperm.slane %v444, 0
      %448 = vset.pattern.permute.xlu0 0
      %449 = vperm.xlu0 %448, %v401
      %v450 = vpop.permute.xlu0 %449
      %v452 = vperm.slane %v450, 0
      %454 = vset.pattern.permute.xlu0 0
      %455 = vperm.xlu0 %454, %v402
      %v456 = vpop.permute.xlu0 %455
      %v458 = vperm.slane %v456, 0
      %v459 = vmul.f32 %v403, %v416
      %v460 = vmul.f32 %v404, %v422
      %v461 = vmul.f32 %v405, %v428
      %v462 = vmul.f32 %v406, %v434
      %v463 = vmul.f32 %v407, %v440
      %v464 = vmul.f32 %v408, %v446
      %v465 = vmul.f32 %v409, %v452
      %v466 = vmul.f32 %v410, %v458
      %v467 = vadd.f32 %v459, 0.0
      %v468 = vadd.f32 %v460, 0.0
      %v469 = vadd.f32 %v461, 0.0
      %v470 = vadd.f32 %v462, 0.0
      %v471 = vadd.f32 %v463, 0.0
      %v472 = vadd.f32 %v464, 0.0
      %v473 = vadd.f32 %v465, 0.0
      %v474 = vadd.f32 %v466, 0.0
      %v475 = vpack.c.bf16 %v467, %v467
      %v476 = vpack.c.bf16 %v468, %v468
      %v477 = vpack.c.bf16 %v469, %v469
      %v478 = vpack.c.bf16 %v470, %v470
      %v479 = vpack.c.bf16 %v471, %v471
      %v480 = vpack.c.bf16 %v472, %v472
      %v481 = vpack.c.bf16 %v473, %v473
      %v482 = vpack.c.bf16 %v474, %v474
      %v483 = vld [vmem:[#allocation9] sm:$0xff]
      %v484 = vld [vmem:[#allocation9 + $0x8] sm:$0xff]
      %v485 = vld [vmem:[#allocation9 + $0x10] sm:$0xff]
      %v486 = vld [vmem:[#allocation9 + $0x18] sm:$0xff]
      %v487 = vld [vmem:[#allocation9 + $0x20] sm:$0xff]
      %v488 = vld [vmem:[#allocation9 + $0x28] sm:$0xff]
      %v489 = vld [vmem:[#allocation9 + $0x30] sm:$0xff]
      %v490 = vld [vmem:[#allocation9 + $0x38] sm:$0xff]
      %v491 = vld [vmem:[#allocation9 + $0x40] sm:$0xff]
      %v492 = vld [vmem:[#allocation9 + $0x48] sm:$0xff]
      %v493 = vld [vmem:[#allocation9 + $0x50] sm:$0xff]
      %v494 = vld [vmem:[#allocation9 + $0x58] sm:$0xff]
      %v495 = vld [vmem:[#allocation9 + $0x60] sm:$0xff]
      %v496 = vld [vmem:[#allocation9 + $0x68] sm:$0xff]
      %v497 = vld [vmem:[#allocation9 + $0x70] sm:$0xff]
      %v498 = vld [vmem:[#allocation9 + $0x78] sm:$0xff]
      %v499 = vld [vmem:[#allocation10] sm:$0xff]
      %v501 = vperm.slane %v499, 0
      %v502 = vperm.slane %v499, 1
      %v503 = vperm.slane %v499, 2
      %v504 = vperm.slane %v499, 3
      %v505 = vperm.slane %v499, 4
      %v506 = vperm.slane %v499, 5
      %v507 = vperm.slane %v499, 6
      %v508 = vperm.slane %v499, 7
      %v525 = vunpack.c.l.b16 %v475
      %v526 = vunpack.c.l.b16 %v476
      %v527 = vunpack.c.l.b16 %v477
      %v528 = vunpack.c.l.b16 %v478
      %v529 = vunpack.c.l.b16 %v479
      %v530 = vunpack.c.l.b16 %v480
      %v531 = vunpack.c.l.b16 %v481
      %v532 = vunpack.c.l.b16 %v482
      %v533 = vrot.slane %v526, 7
      %vm534 = vcmask 1041409
      %v535 = vsel %vm534, %v533, %v525
      %v536 = vrot.slane %v527, 6
      %vm537 = vcmask 1042434
      %v538 = vsel %vm537, %v536, %v535
      %v539 = vrot.slane %v528, 5
      %vm540 = vcmask 1043459
      %v541 = vsel %vm540, %v539, %v538
      %v542 = vrot.slane %v529, 4
      %vm543 = vcmask 1044484
      %v544 = vsel %vm543, %v542, %v541
      %v545 = vrot.slane %v530, 3
      %vm546 = vcmask 1045509
      %v547 = vsel %vm546, %v545, %v544
      %v548 = vrot.slane %v531, 2
      %vm549 = vcmask 1046534
      %v550 = vsel %vm549, %v548, %v547
      %v551 = vrot.slane %v532, 1
      %vm552 = vcmask 1047559
      %v553 = vsel %vm552, %v551, %v550
      %v554 = vpack.c.b16 %v553, %v553
      %v571 = vunpack.c.l.b16 %v483
      %v572 = vunpack.c.h.b16 %v483
      %v573 = vunpack.c.l.b16 %v484
      %v574 = vunpack.c.h.b16 %v484
      %v575 = vunpack.c.l.b16 %v485
      %v576 = vunpack.c.h.b16 %v485
      %v577 = vunpack.c.l.b16 %v486
      %v578 = vunpack.c.h.b16 %v486
      %v579 = vunpack.c.l.b16 %v487
      %v580 = vunpack.c.h.b16 %v487
      %v581 = vunpack.c.l.b16 %v488
      %v582 = vunpack.c.h.b16 %v488
      %v583 = vunpack.c.l.b16 %v489
      %v584 = vunpack.c.h.b16 %v489
      %v585 = vunpack.c.l.b16 %v490
      %v586 = vunpack.c.h.b16 %v490
      %v587 = vunpack.c.l.b16 %v491
      %v588 = vunpack.c.h.b16 %v491
      %v589 = vunpack.c.l.b16 %v492
      %v590 = vunpack.c.h.b16 %v492
      %v591 = vunpack.c.l.b16 %v493
      %v592 = vunpack.c.h.b16 %v493
      %v593 = vunpack.c.l.b16 %v494
      %v594 = vunpack.c.h.b16 %v494
      %v595 = vunpack.c.l.b16 %v495
      %v596 = vunpack.c.h.b16 %v495
      %v597 = vunpack.c.l.b16 %v496
      %v598 = vunpack.c.h.b16 %v496
      %v599 = vunpack.c.l.b16 %v497
      %v600 = vunpack.c.h.b16 %v497
      %v601 = vunpack.c.l.b16 %v498
      %v602 = vunpack.c.h.b16 %v498
      %v603 = vpack.c.b16 %v579, %v571
      %v604 = vpack.c.b16 %v580, %v572
      %v605 = vpack.c.b16 %v581, %v573
      %v606 = vpack.c.b16 %v582, %v574
      %v607 = vpack.c.b16 %v583, %v575
      %v608 = vpack.c.b16 %v584, %v576
      %v609 = vpack.c.b16 %v585, %v577
      %v610 = vpack.c.b16 %v586, %v578
      %v611 = vpack.c.b16 %v595, %v587
      %v612 = vpack.c.b16 %v596, %v588
      %v613 = vpack.c.b16 %v597, %v589
      %v614 = vpack.c.b16 %v598, %v590
      %v615 = vpack.c.b16 %v599, %v591
      %v616 = vpack.c.b16 %v600, %v592
      %v617 = vpack.c.b16 %v601, %v593
      %v618 = vpack.c.b16 %v602, %v594
      %vm635 = vcmask 261120
      %v637 = vsel %vm635, %v554, 0
      %639 = vmatpush.bf16.msra.mxu0 0
      %640 = vmatpush.bf16.msra.mxu0 0
      %641 = vmatpush.bf16.msra.mxu0 0
      %642 = vmatpush.bf16.msra.mxu0 0
      %643 = vmatpush.bf16.msra.mxu0 0
      %644 = vmatpush.bf16.msra.mxu0 0
      %645 = vmatpush.bf16.msra.mxu0 %v611
      %646 = vmatpush.bf16.msra.mxu0 %v603
      %647 = vmatmul.bf16.gmra.mxu0 %v637
      %v648 = vpop.f32.mrf.mxu0
      %v649 = vadd.f32 %v501, %v648
      %v650 = vpop.f32.mrf.mxu0
      %651 = vdwg.mxu0
      %652 = vmatpush.bf16.msra.mxu0 0
      %653 = vmatpush.bf16.msra.mxu0 0
      %654 = vmatpush.bf16.msra.mxu0 0
      %655 = vmatpush.bf16.msra.mxu0 0
      %656 = vmatpush.bf16.msra.mxu0 0
      %657 = vmatpush.bf16.msra.mxu0 0
      %658 = vmatpush.bf16.msra.mxu0 %v612
      %659 = vmatpush.bf16.msra.mxu0 %v604
      %660 = vmatmul.bf16.gmra.mxu0 %v637
      %v661 = vpop.f32.mrf.mxu0
      %v662 = vadd.f32 %v502, %v661
      %v663 = vpop.f32.mrf.mxu0
      %664 = vdwg.mxu0
      %665 = vmatpush.bf16.msra.mxu0 0
      %666 = vmatpush.bf16.msra.mxu0 0
      %667 = vmatpush.bf16.msra.mxu0 0
      %668 = vmatpush.bf16.msra.mxu0 0
      %669 = vmatpush.bf16.msra.mxu0 0
      %670 = vmatpush.bf16.msra.mxu0 0
      %671 = vmatpush.bf16.msra.mxu0 %v613
      %672 = vmatpush.bf16.msra.mxu0 %v605
      %673 = vmatmul.bf16.gmra.mxu0 %v637
      %v674 = vpop.f32.mrf.mxu0
      %v675 = vadd.f32 %v503, %v674
      %v676 = vpop.f32.mrf.mxu0
      %677 = vdwg.mxu0
      %678 = vmatpush.bf16.msra.mxu0 0
      %679 = vmatpush.bf16.msra.mxu0 0
      %680 = vmatpush.bf16.msra.mxu0 0
      %681 = vmatpush.bf16.msra.mxu0 0
      %682 = vmatpush.bf16.msra.mxu0 0
      %683 = vmatpush.bf16.msra.mxu0 0
      %684 = vmatpush.bf16.msra.mxu0 %v614
      %685 = vmatpush.bf16.msra.mxu0 %v606
      %686 = vmatmul.bf16.gmra.mxu0 %v637
      %v687 = vpop.f32.mrf.mxu0
      %v688 = vadd.f32 %v504, %v687
      %v689 = vpop.f32.mrf.mxu0
      %690 = vdwg.mxu0
      %691 = vmatpush.bf16.msra.mxu0 0
      %692 = vmatpush.bf16.msra.mxu0 0
      %693 = vmatpush.bf16.msra.mxu0 0
      %694 = vmatpush.bf16.msra.mxu0 0
      %695 = vmatpush.bf16.msra.mxu0 0
      %696 = vmatpush.bf16.msra.mxu0 0
      %697 = vmatpush.bf16.msra.mxu0 %v615
      %698 = vmatpush.bf16.msra.mxu0 %v607
      %699 = vmatmul.bf16.gmra.mxu0 %v637
      %v700 = vpop.f32.mrf.mxu0
      %v701 = vadd.f32 %v505, %v700
      %v702 = vpop.f32.mrf.mxu0
      %703 = vdwg.mxu0
      %704 = vmatpush.bf16.msra.mxu0 0
      %705 = vmatpush.bf16.msra.mxu0 0
      %706 = vmatpush.bf16.msra.mxu0 0
      %707 = vmatpush.bf16.msra.mxu0 0
      %708 = vmatpush.bf16.msra.mxu0 0
      %709 = vmatpush.bf16.msra.mxu0 0
      %710 = vmatpush.bf16.msra.mxu0 %v616
      %711 = vmatpush.bf16.msra.mxu0 %v608
      %712 = vmatmul.bf16.gmra.mxu0 %v637
      %v713 = vpop.f32.mrf.mxu0
      %v714 = vadd.f32 %v506, %v713
      %v715 = vpop.f32.mrf.mxu0
      %716 = vdwg.mxu0
      %717 = vmatpush.bf16.msra.mxu0 0
      %718 = vmatpush.bf16.msra.mxu0 0
      %719 = vmatpush.bf16.msra.mxu0 0
      %720 = vmatpush.bf16.msra.mxu0 0
      %721 = vmatpush.bf16.msra.mxu0 0
      %722 = vmatpush.bf16.msra.mxu0 0
      %723 = vmatpush.bf16.msra.mxu0 %v617
      %724 = vmatpush.bf16.msra.mxu0 %v609
      %725 = vmatmul.bf16.gmra.mxu0 %v637
      %v726 = vpop.f32.mrf.mxu0
      %v727 = vadd.f32 %v507, %v726
      %v728 = vpop.f32.mrf.mxu0
      %729 = vdwg.mxu0
      %730 = vmatpush.bf16.msra.mxu0 0
      %731 = vmatpush.bf16.msra.mxu0 0
      %732 = vmatpush.bf16.msra.mxu0 0
      %733 = vmatpush.bf16.msra.mxu0 0
      %734 = vmatpush.bf16.msra.mxu0 0
      %735 = vmatpush.bf16.msra.mxu0 0
      %736 = vmatpush.bf16.msra.mxu0 %v618
      %737 = vmatpush.bf16.msra.mxu0 %v610
      %738 = vmatmul.bf16.gmra.mxu0 %v637
      %v739 = vpop.f32.mrf.mxu0
      %v740 = vadd.f32 %v508, %v739
      %v741 = vpop.f32.mrf.mxu0
      %742 = vdwg.mxu0
      %v743 = vmax.f32 %v649, 0.0
      %v744 = vmax.f32 %v662, 0.0
      %v745 = vmax.f32 %v675, 0.0
      %v746 = vmax.f32 %v688, 0.0
      %v747 = vmax.f32 %v701, 0.0
      %v748 = vmax.f32 %v714, 0.0
      %v749 = vmax.f32 %v727, 0.0
      %v750 = vmax.f32 %v740, 0.0
      %v751 = vpack.c.bf16 %v743, %v743
      %v752 = vpack.c.bf16 %v744, %v744
      %v753 = vpack.c.bf16 %v745, %v745
      %v754 = vpack.c.bf16 %v746, %v746
      %v755 = vpack.c.bf16 %v747, %v747
      %v756 = vpack.c.bf16 %v748, %v748
      %v757 = vpack.c.bf16 %v749, %v749
      %v758 = vpack.c.bf16 %v750, %v750
      %v759 = vld [vmem:[#allocation12] sm:$0xf]
      %v760 = vld [vmem:[#allocation12 + $0x4] sm:$0xf]
      %v761 = vld [vmem:[#allocation12 + $0x8] sm:$0xf]
      %v762 = vld [vmem:[#allocation12 + $0xc] sm:$0xf]
      %v763 = vld [vmem:[#allocation12 + $0x10] sm:$0xf]
      %v764 = vld [vmem:[#allocation12 + $0x14] sm:$0xf]
      %v765 = vld [vmem:[#allocation12 + $0x18] sm:$0xf]
      %v766 = vld [vmem:[#allocation12 + $0x1c] sm:$0xf]
      %v767 = vld [vmem:[#allocation12 + $0x20] sm:$0xf]
      %v768 = vld [vmem:[#allocation12 + $0x24] sm:$0xf]
      %v769 = vld [vmem:[#allocation12 + $0x28] sm:$0xf]
      %v770 = vld [vmem:[#allocation12 + $0x2c] sm:$0xf]
      %v771 = vld [vmem:[#allocation12 + $0x30] sm:$0xf]
      %v772 = vld [vmem:[#allocation12 + $0x34] sm:$0xf]
      %v773 = vld [vmem:[#allocation12 + $0x38] sm:$0xf]
      %v774 = vld [vmem:[#allocation12 + $0x3c] sm:$0xf]
      %v775 = vld [vmem:[#allocation12 + $0x40] sm:$0xf]
      %v776 = vld [vmem:[#allocation12 + $0x44] sm:$0xf]
      %v777 = vld [vmem:[#allocation12 + $0x48] sm:$0xf]
      %v778 = vld [vmem:[#allocation12 + $0x4c] sm:$0xf]
      %v779 = vld [vmem:[#allocation12 + $0x50] sm:$0xf]
      %v780 = vld [vmem:[#allocation12 + $0x54] sm:$0xf]
      %v781 = vld [vmem:[#allocation12 + $0x58] sm:$0xf]
      %v782 = vld [vmem:[#allocation12 + $0x5c] sm:$0xf]
      %v783 = vld [vmem:[#allocation12 + $0x60] sm:$0xf]
      %v784 = vld [vmem:[#allocation12 + $0x64] sm:$0xf]
      %v785 = vld [vmem:[#allocation12 + $0x68] sm:$0xf]
      %v786 = vld [vmem:[#allocation12 + $0x6c] sm:$0xf]
      %v787 = vld [vmem:[#allocation12 + $0x70] sm:$0xf]
      %v788 = vld [vmem:[#allocation12 + $0x74] sm:$0xf]
      %v789 = vld [vmem:[#allocation12 + $0x78] sm:$0xf]
      %v790 = vld [vmem:[#allocation12 + $0x7c] sm:$0xf]
      %v791 = vld [vmem:[#allocation12 + $0x80] sm:$0xf]
      %v792 = vld [vmem:[#allocation12 + $0x84] sm:$0xf]
      %v793 = vld [vmem:[#allocation12 + $0x88] sm:$0xf]
      %v794 = vld [vmem:[#allocation12 + $0x8c] sm:$0xf]
      %v795 = vld [vmem:[#allocation12 + $0x90] sm:$0xf]
      %v796 = vld [vmem:[#allocation12 + $0x94] sm:$0xf]
      %v797 = vld [vmem:[#allocation12 + $0x98] sm:$0xf]
      %v798 = vld [vmem:[#allocation12 + $0x9c] sm:$0xf]
      %v799 = vld [vmem:[#allocation12 + $0xa0] sm:$0xf]
      %v800 = vld [vmem:[#allocation12 + $0xa4] sm:$0xf]
      %v801 = vld [vmem:[#allocation12 + $0xa8] sm:$0xf]
      %v802 = vld [vmem:[#allocation12 + $0xac] sm:$0xf]
      %v803 = vld [vmem:[#allocation12 + $0xb0] sm:$0xf]
      %v804 = vld [vmem:[#allocation12 + $0xb4] sm:$0xf]
      %v805 = vld [vmem:[#allocation12 + $0xb8] sm:$0xf]
      %v806 = vld [vmem:[#allocation12 + $0xbc] sm:$0xf]
      %v807 = vld [vmem:[#allocation12 + $0xc0] sm:$0xf]
      %v808 = vld [vmem:[#allocation12 + $0xc4] sm:$0xf]
      %v809 = vld [vmem:[#allocation12 + $0xc8] sm:$0xf]
      %v810 = vld [vmem:[#allocation12 + $0xcc] sm:$0xf]
      %v811 = vld [vmem:[#allocation12 + $0xd0] sm:$0xf]
      %v812 = vld [vmem:[#allocation12 + $0xd4] sm:$0xf]
      %v813 = vld [vmem:[#allocation12 + $0xd8] sm:$0xf]
      %v814 = vld [vmem:[#allocation12 + $0xdc] sm:$0xf]
      %v815 = vld [vmem:[#allocation12 + $0xe0] sm:$0xf]
      %v816 = vld [vmem:[#allocation12 + $0xe4] sm:$0xf]
      %v817 = vld [vmem:[#allocation12 + $0xe8] sm:$0xf]
      %v818 = vld [vmem:[#allocation12 + $0xec] sm:$0xf]
      %v819 = vld [vmem:[#allocation12 + $0xf0] sm:$0xf]
      %v820 = vld [vmem:[#allocation12 + $0xf4] sm:$0xf]
      %v821 = vld [vmem:[#allocation12 + $0xf8] sm:$0xf]
      %v822 = vld [vmem:[#allocation12 + $0xfc] sm:$0xf]
      %v823 = vld [vmem:[#allocation12 + $0x100] sm:$0xf]
      %v824 = vld [vmem:[#allocation12 + $0x104] sm:$0xf]
      %v825 = vld [vmem:[#allocation12 + $0x108] sm:$0xf]
      %v826 = vld [vmem:[#allocation12 + $0x10c] sm:$0xf]
      %v827 = vld [vmem:[#allocation12 + $0x110] sm:$0xf]
      %v828 = vld [vmem:[#allocation12 + $0x114] sm:$0xf]
      %v829 = vld [vmem:[#allocation12 + $0x118] sm:$0xf]
      %v830 = vld [vmem:[#allocation12 + $0x11c] sm:$0xf]
      %v831 = vld [vmem:[#allocation12 + $0x120] sm:$0xf]
      %v832 = vld [vmem:[#allocation12 + $0x124] sm:$0xf]
      %v833 = vld [vmem:[#allocation12 + $0x128] sm:$0xf]
      %v834 = vld [vmem:[#allocation12 + $0x12c] sm:$0xf]
      %v835 = vld [vmem:[#allocation12 + $0x130] sm:$0xf]
      %v836 = vld [vmem:[#allocation12 + $0x134] sm:$0xf]
      %v837 = vld [vmem:[#allocation12 + $0x138] sm:$0xf]
      %v838 = vld [vmem:[#allocation12 + $0x13c] sm:$0xf]
      %v839 = vld [vmem:[#allocation12 + $0x140] sm:$0xf]
      %v840 = vld [vmem:[#allocation12 + $0x144] sm:$0xf]
      %v841 = vld [vmem:[#allocation12 + $0x148] sm:$0xf]
      %v842 = vld [vmem:[#allocation12 + $0x14c] sm:$0xf]
      %v843 = vld [vmem:[#allocation12 + $0x150] sm:$0xf]
      %v844 = vld [vmem:[#allocation12 + $0x154] sm:$0xf]
      %v845 = vld [vmem:[#allocation12 + $0x158] sm:$0xf]
      %v846 = vld [vmem:[#allocation12 + $0x15c] sm:$0xf]
      %v847 = vld [vmem:[#allocation12 + $0x160] sm:$0xf]
      %v848 = vld [vmem:[#allocation12 + $0x164] sm:$0xf]
      %v849 = vld [vmem:[#allocation12 + $0x168] sm:$0xf]
      %v850 = vld [vmem:[#allocation12 + $0x16c] sm:$0xf]
      %v851 = vld [vmem:[#allocation12 + $0x170] sm:$0xf]
      %v852 = vld [vmem:[#allocation12 + $0x174] sm:$0xf]
      %v853 = vld [vmem:[#allocation12 + $0x178] sm:$0xf]
      %v854 = vld [vmem:[#allocation12 + $0x17c] sm:$0xf]
      %v855 = vld [vmem:[#allocation12 + $0x180] sm:$0xf]
      %v856 = vld [vmem:[#allocation12 + $0x184] sm:$0xf]
      %v857 = vld [vmem:[#allocation12 + $0x188] sm:$0xf]
      %v858 = vld [vmem:[#allocation12 + $0x18c] sm:$0xf]
      %v859 = vld [vmem:[#allocation12 + $0x190] sm:$0xf]
      %v860 = vld [vmem:[#allocation12 + $0x194] sm:$0xf]
      %v861 = vld [vmem:[#allocation12 + $0x198] sm:$0xf]
      %v862 = vld [vmem:[#allocation12 + $0x19c] sm:$0xf]
      %v863 = vld [vmem:[#allocation12 + $0x1a0] sm:$0xf]
      %v864 = vld [vmem:[#allocation12 + $0x1a4] sm:$0xf]
      %v865 = vld [vmem:[#allocation12 + $0x1a8] sm:$0xf]
      %v866 = vld [vmem:[#allocation12 + $0x1ac] sm:$0xf]
      %v867 = vld [vmem:[#allocation12 + $0x1b0] sm:$0xf]
      %v868 = vld [vmem:[#allocation12 + $0x1b4] sm:$0xf]
      %v869 = vld [vmem:[#allocation12 + $0x1b8] sm:$0xf]
      %v870 = vld [vmem:[#allocation12 + $0x1bc] sm:$0xf]
      %v871 = vld [vmem:[#allocation12 + $0x1c0] sm:$0xf]
      %v872 = vld [vmem:[#allocation12 + $0x1c4] sm:$0xf]
      %v873 = vld [vmem:[#allocation12 + $0x1c8] sm:$0xf]
      %v874 = vld [vmem:[#allocation12 + $0x1cc] sm:$0xf]
      %v875 = vld [vmem:[#allocation12 + $0x1d0] sm:$0xf]
      %v876 = vld [vmem:[#allocation12 + $0x1d4] sm:$0xf]
      %v877 = vld [vmem:[#allocation12 + $0x1d8] sm:$0xf]
      %v878 = vld [vmem:[#allocation12 + $0x1dc] sm:$0xf]
      %v879 = vld [vmem:[#allocation12 + $0x1e0] sm:$0xf]
      %v880 = vld [vmem:[#allocation12 + $0x1e4] sm:$0xf]
      %v881 = vld [vmem:[#allocation12 + $0x1e8] sm:$0xf]
      %v882 = vld [vmem:[#allocation12 + $0x1ec] sm:$0xf]
      %v883 = vld [vmem:[#allocation12 + $0x1f0] sm:$0xf]
      %v884 = vld [vmem:[#allocation12 + $0x1f4] sm:$0xf]
      %v885 = vld [vmem:[#allocation12 + $0x1f8] sm:$0xf]
      %v886 = vld [vmem:[#allocation12 + $0x1fc] sm:$0xf]
      %v887 = vld [vmem:[%s5] sm:$0x1]
      %v889 = vperm.slane %v887, 0
      %v1019 = vunpack.c.l.b16 %v759
      %v1020 = vunpack.c.l.b16 %v760
      %v1021 = vunpack.c.l.b16 %v761
      %v1022 = vunpack.c.l.b16 %v762
      %v1023 = vunpack.c.l.b16 %v763
      %v1024 = vunpack.c.l.b16 %v764
      %v1025 = vunpack.c.l.b16 %v765
      %v1026 = vunpack.c.l.b16 %v766
      %v1027 = vunpack.c.l.b16 %v767
      %v1028 = vunpack.c.l.b16 %v768
      %v1029 = vunpack.c.l.b16 %v769
      %v1030 = vunpack.c.l.b16 %v770
      %v1031 = vunpack.c.l.b16 %v771
      %v1032 = vunpack.c.l.b16 %v772
      %v1033 = vunpack.c.l.b16 %v773
      %v1034 = vunpack.c.l.b16 %v774
      %v1035 = vunpack.c.l.b16 %v775
      %v1036 = vunpack.c.l.b16 %v776
      %v1037 = vunpack.c.l.b16 %v777
      %v1038 = vunpack.c.l.b16 %v778
      %v1039 = vunpack.c.l.b16 %v779
      %v1040 = vunpack.c.l.b16 %v780
      %v1041 = vunpack.c.l.b16 %v781
      %v1042 = vunpack.c.l.b16 %v782
      %v1043 = vunpack.c.l.b16 %v783
      %v1044 = vunpack.c.l.b16 %v784
      %v1045 = vunpack.c.l.b16 %v785
      %v1046 = vunpack.c.l.b16 %v786
      %v1047 = vunpack.c.l.b16 %v787
      %v1048 = vunpack.c.l.b16 %v788
      %v1049 = vunpack.c.l.b16 %v789
      %v1050 = vunpack.c.l.b16 %v790
      %v1051 = vunpack.c.l.b16 %v791
      %v1052 = vunpack.c.l.b16 %v792
      %v1053 = vunpack.c.l.b16 %v793
      %v1054 = vunpack.c.l.b16 %v794
      %v1055 = vunpack.c.l.b16 %v795
      %v1056 = vunpack.c.l.b16 %v796
      %v1057 = vunpack.c.l.b16 %v797
      %v1058 = vunpack.c.l.b16 %v798
      %v1059 = vunpack.c.l.b16 %v799
      %v1060 = vunpack.c.l.b16 %v800
      %v1061 = vunpack.c.l.b16 %v801
      %v1062 = vunpack.c.l.b16 %v802
      %v1063 = vunpack.c.l.b16 %v803
      %v1064 = vunpack.c.l.b16 %v804
      %v1065 = vunpack.c.l.b16 %v805
      %v1066 = vunpack.c.l.b16 %v806
      %v1067 = vunpack.c.l.b16 %v807
      %v1068 = vunpack.c.l.b16 %v808
      %v1069 = vunpack.c.l.b16 %v809
      %v1070 = vunpack.c.l.b16 %v810
      %v1071 = vunpack.c.l.b16 %v811
      %v1072 = vunpack.c.l.b16 %v812
      %v1073 = vunpack.c.l.b16 %v813
      %v1074 = vunpack.c.l.b16 %v814
      %v1075 = vunpack.c.l.b16 %v815
      %v1076 = vunpack.c.l.b16 %v816
      %v1077 = vunpack.c.l.b16 %v817
      %v1078 = vunpack.c.l.b16 %v818
      %v1079 = vunpack.c.l.b16 %v819
      %v1080 = vunpack.c.l.b16 %v820
      %v1081 = vunpack.c.l.b16 %v821
      %v1082 = vunpack.c.l.b16 %v822
      %v1083 = vunpack.c.l.b16 %v823
      %v1084 = vunpack.c.l.b16 %v824
      %v1085 = vunpack.c.l.b16 %v825
      %v1086 = vunpack.c.l.b16 %v826
      %v1087 = vunpack.c.l.b16 %v827
      %v1088 = vunpack.c.l.b16 %v828
      %v1089 = vunpack.c.l.b16 %v829
      %v1090 = vunpack.c.l.b16 %v830
      %v1091 = vunpack.c.l.b16 %v831
      %v1092 = vunpack.c.l.b16 %v832
      %v1093 = vunpack.c.l.b16 %v833
      %v1094 = vunpack.c.l.b16 %v834
      %v1095 = vunpack.c.l.b16 %v835
      %v1096 = vunpack.c.l.b16 %v836
      %v1097 = vunpack.c.l.b16 %v837
      %v1098 = vunpack.c.l.b16 %v838
      %v1099 = vunpack.c.l.b16 %v839
      %v1100 = vunpack.c.l.b16 %v840
      %v1101 = vunpack.c.l.b16 %v841
      %v1102 = vunpack.c.l.b16 %v842
      %v1103 = vunpack.c.l.b16 %v843
      %v1104 = vunpack.c.l.b16 %v844
      %v1105 = vunpack.c.l.b16 %v845
      %v1106 = vunpack.c.l.b16 %v846
      %v1107 = vunpack.c.l.b16 %v847
      %v1108 = vunpack.c.l.b16 %v848
      %v1109 = vunpack.c.l.b16 %v849
      %v1110 = vunpack.c.l.b16 %v850
      %v1111 = vunpack.c.l.b16 %v851
      %v1112 = vunpack.c.l.b16 %v852
      %v1113 = vunpack.c.l.b16 %v853
      %v1114 = vunpack.c.l.b16 %v854
      %v1115 = vunpack.c.l.b16 %v855
      %v1116 = vunpack.c.l.b16 %v856
      %v1117 = vunpack.c.l.b16 %v857
      %v1118 = vunpack.c.l.b16 %v858
      %v1119 = vunpack.c.l.b16 %v859
      %v1120 = vunpack.c.l.b16 %v860
      %v1121 = vunpack.c.l.b16 %v861
      %v1122 = vunpack.c.l.b16 %v862
      %v1123 = vunpack.c.l.b16 %v863
      %v1124 = vunpack.c.l.b16 %v864
      %v1125 = vunpack.c.l.b16 %v865
      %v1126 = vunpack.c.l.b16 %v866
      %v1127 = vunpack.c.l.b16 %v867
      %v1128 = vunpack.c.l.b16 %v868
      %v1129 = vunpack.c.l.b16 %v869
      %v1130 = vunpack.c.l.b16 %v870
      %v1131 = vunpack.c.l.b16 %v871
      %v1132 = vunpack.c.l.b16 %v872
      %v1133 = vunpack.c.l.b16 %v873
      %v1134 = vunpack.c.l.b16 %v874
      %v1135 = vunpack.c.l.b16 %v875
      %v1136 = vunpack.c.l.b16 %v876
      %v1137 = vunpack.c.l.b16 %v877
      %v1138 = vunpack.c.l.b16 %v878
      %v1139 = vunpack.c.l.b16 %v879
      %v1140 = vunpack.c.l.b16 %v880
      %v1141 = vunpack.c.l.b16 %v881
      %v1142 = vunpack.c.l.b16 %v882
      %v1143 = vunpack.c.l.b16 %v883
      %v1144 = vunpack.c.l.b16 %v884
      %v1145 = vunpack.c.l.b16 %v885
      %v1146 = vunpack.c.l.b16 %v886
      %v1147 = vpack.c.b16 %v1020, %v1019
      %v1148 = vpack.c.b16 %v1022, %v1021
      %v1149 = vpack.c.b16 %v1024, %v1023
      %v1150 = vpack.c.b16 %v1026, %v1025
      %v1151 = vpack.c.b16 %v1028, %v1027
      %v1152 = vpack.c.b16 %v1030, %v1029
      %v1153 = vpack.c.b16 %v1032, %v1031
      %v1154 = vpack.c.b16 %v1034, %v1033
      %v1155 = vpack.c.b16 %v1036, %v1035
      %v1156 = vpack.c.b16 %v1038, %v1037
      %v1157 = vpack.c.b16 %v1040, %v1039
      %v1158 = vpack.c.b16 %v1042, %v1041
      %v1159 = vpack.c.b16 %v1044, %v1043
      %v1160 = vpack.c.b16 %v1046, %v1045
      %v1161 = vpack.c.b16 %v1048, %v1047
      %v1162 = vpack.c.b16 %v1050, %v1049
      %v1163 = vpack.c.b16 %v1052, %v1051
      %v1164 = vpack.c.b16 %v1054, %v1053
      %v1165 = vpack.c.b16 %v1056, %v1055
      %v1166 = vpack.c.b16 %v1058, %v1057
      %v1167 = vpack.c.b16 %v1060, %v1059
      %v1168 = vpack.c.b16 %v1062, %v1061
      %v1169 = vpack.c.b16 %v1064, %v1063
      %v1170 = vpack.c.b16 %v1066, %v1065
      %v1171 = vpack.c.b16 %v1068, %v1067
      %v1172 = vpack.c.b16 %v1070, %v1069
      %v1173 = vpack.c.b16 %v1072, %v1071
      %v1174 = vpack.c.b16 %v1074, %v1073
      %v1175 = vpack.c.b16 %v1076, %v1075
      %v1176 = vpack.c.b16 %v1078, %v1077
      %v1177 = vpack.c.b16 %v1080, %v1079
      %v1178 = vpack.c.b16 %v1082, %v1081
      %v1179 = vpack.c.b16 %v1084, %v1083
      %v1180 = vpack.c.b16 %v1086, %v1085
      %v1181 = vpack.c.b16 %v1088, %v1087
      %v1182 = vpack.c.b16 %v1090, %v1089
      %v1183 = vpack.c.b16 %v1092, %v1091
      %v1184 = vpack.c.b16 %v1094, %v1093
      %v1185 = vpack.c.b16 %v1096, %v1095
      %v1186 = vpack.c.b16 %v1098, %v1097
      %v1187 = vpack.c.b16 %v1100, %v1099
      %v1188 = vpack.c.b16 %v1102, %v1101
      %v1189 = vpack.c.b16 %v1104, %v1103
      %v1190 = vpack.c.b16 %v1106, %v1105
      %v1191 = vpack.c.b16 %v1108, %v1107
      %v1192 = vpack.c.b16 %v1110, %v1109
      %v1193 = vpack.c.b16 %v1112, %v1111
      %v1194 = vpack.c.b16 %v1114, %v1113
      %v1195 = vpack.c.b16 %v1116, %v1115
      %v1196 = vpack.c.b16 %v1118, %v1117
      %v1197 = vpack.c.b16 %v1120, %v1119
      %v1198 = vpack.c.b16 %v1122, %v1121
      %v1199 = vpack.c.b16 %v1124, %v1123
      %v1200 = vpack.c.b16 %v1126, %v1125
      %v1201 = vpack.c.b16 %v1128, %v1127
      %v1202 = vpack.c.b16 %v1130, %v1129
      %v1203 = vpack.c.b16 %v1132, %v1131
      %v1204 = vpack.c.b16 %v1134, %v1133
      %v1205 = vpack.c.b16 %v1136, %v1135
      %v1206 = vpack.c.b16 %v1138, %v1137
      %v1207 = vpack.c.b16 %v1140, %v1139
      %v1208 = vpack.c.b16 %v1142, %v1141
      %v1209 = vpack.c.b16 %v1144, %v1143
      %v1210 = vpack.c.b16 %v1146, %v1145
      %1275 = vmatpush.bf16.msra.mxu0 %v1154
      %1276 = vmatpush.bf16.msra.mxu0 %v1153
      %1277 = vmatpush.bf16.msra.mxu0 %v1152
      %1278 = vmatpush.bf16.msra.mxu0 %v1151
      %1279 = vmatpush.bf16.msra.mxu0 %v1150
      %1280 = vmatpush.bf16.msra.mxu0 %v1149
      %1281 = vmatpush.bf16.msra.mxu0 %v1148
      %1282 = vmatpush.bf16.msra.mxu0 %v1147
      %1283 = vmatmul.bf16.gmra.mxu0 %v751
      %v1284 = vpop.f32.mrf.mxu0
      %v1285 = vadd.f32 %v889, %v1284
      %v1286 = vpop.f32.mrf.mxu0
      %1287 = vdwg.mxu0
      %1288 = vmatpush.bf16.msra.mxu0 %v1162
      %1289 = vmatpush.bf16.msra.mxu0 %v1161
      %1290 = vmatpush.bf16.msra.mxu0 %v1160
      %1291 = vmatpush.bf16.msra.mxu0 %v1159
      %1292 = vmatpush.bf16.msra.mxu0 %v1158
      %1293 = vmatpush.bf16.msra.mxu0 %v1157
      %1294 = vmatpush.bf16.msra.mxu0 %v1156
      %1295 = vmatpush.bf16.msra.mxu0 %v1155
      %1296 = vmatmul.bf16.gmra.mxu0 %v752
      %v1297 = vpop.f32.mrf.mxu0
      %v1298 = vadd.f32 %v1285, %v1297
      %v1299 = vpop.f32.mrf.mxu0
      %1300 = vdwg.mxu0
      %1301 = vmatpush.bf16.msra.mxu0 %v1170
      %1302 = vmatpush.bf16.msra.mxu0 %v1169
      %1303 = vmatpush.bf16.msra.mxu0 %v1168
      %1304 = vmatpush.bf16.msra.mxu0 %v1167
      %1305 = vmatpush.bf16.msra.mxu0 %v1166
      %1306 = vmatpush.bf16.msra.mxu0 %v1165
      %1307 = vmatpush.bf16.msra.mxu0 %v1164
      %1308 = vmatpush.bf16.msra.mxu0 %v1163
      %1309 = vmatmul.bf16.gmra.mxu0 %v753
      %v1310 = vpop.f32.mrf.mxu0
      %v1311 = vadd.f32 %v1298, %v1310
      %v1312 = vpop.f32.mrf.mxu0
      %1313 = vdwg.mxu0
      %1314 = vmatpush.bf16.msra.mxu0 %v1178
      %1315 = vmatpush.bf16.msra.mxu0 %v1177
      %1316 = vmatpush.bf16.msra.mxu0 %v1176
      %1317 = vmatpush.bf16.msra.mxu0 %v1175
      %1318 = vmatpush.bf16.msra.mxu0 %v1174
      %1319 = vmatpush.bf16.msra.mxu0 %v1173
      %1320 = vmatpush.bf16.msra.mxu0 %v1172
      %1321 = vmatpush.bf16.msra.mxu0 %v1171
      %1322 = vmatmul.bf16.gmra.mxu0 %v754
      %v1323 = vpop.f32.mrf.mxu0
      %v1324 = vadd.f32 %v1311, %v1323
      %v1325 = vpop.f32.mrf.mxu0
      %1326 = vdwg.mxu0
      %1327 = vmatpush.bf16.msra.mxu0 %v1186
      %1328 = vmatpush.bf16.msra.mxu0 %v1185
      %1329 = vmatpush.bf16.msra.mxu0 %v1184
      %1330 = vmatpush.bf16.msra.mxu0 %v1183
      %1331 = vmatpush.bf16.msra.mxu0 %v1182
      %1332 = vmatpush.bf16.msra.mxu0 %v1181
      %1333 = vmatpush.bf16.msra.mxu0 %v1180
      %1334 = vmatpush.bf16.msra.mxu0 %v1179
      %1335 = vmatmul.bf16.gmra.mxu0 %v755
      %v1336 = vpop.f32.mrf.mxu0
      %v1337 = vadd.f32 %v1324, %v1336
      %v1338 = vpop.f32.mrf.mxu0
      %1339 = vdwg.mxu0
      %1340 = vmatpush.bf16.msra.mxu0 %v1194
      %1341 = vmatpush.bf16.msra.mxu0 %v1193
      %1342 = vmatpush.bf16.msra.mxu0 %v1192
      %1343 = vmatpush.bf16.msra.mxu0 %v1191
      %1344 = vmatpush.bf16.msra.mxu0 %v1190
      %1345 = vmatpush.bf16.msra.mxu0 %v1189
      %1346 = vmatpush.bf16.msra.mxu0 %v1188
      %1347 = vmatpush.bf16.msra.mxu0 %v1187
      %1348 = vmatmul.bf16.gmra.mxu0 %v756
      %v1349 = vpop.f32.mrf.mxu0
      %v1350 = vadd.f32 %v1337, %v1349
      %v1351 = vpop.f32.mrf.mxu0
      %1352 = vdwg.mxu0
      %1353 = vmatpush.bf16.msra.mxu0 %v1202
      %1354 = vmatpush.bf16.msra.mxu0 %v1201
      %1355 = vmatpush.bf16.msra.mxu0 %v1200
      %1356 = vmatpush.bf16.msra.mxu0 %v1199
      %1357 = vmatpush.bf16.msra.mxu0 %v1198
      %1358 = vmatpush.bf16.msra.mxu0 %v1197
      %1359 = vmatpush.bf16.msra.mxu0 %v1196
      %1360 = vmatpush.bf16.msra.mxu0 %v1195
      %1361 = vmatmul.bf16.gmra.mxu0 %v757
      %v1362 = vpop.f32.mrf.mxu0
      %v1363 = vadd.f32 %v1350, %v1362
      %v1364 = vpop.f32.mrf.mxu0
      %1365 = vdwg.mxu0
      %1366 = vmatpush.bf16.msra.mxu0 %v1210
      %1367 = vmatpush.bf16.msra.mxu0 %v1209
      %1368 = vmatpush.bf16.msra.mxu0 %v1208
      %1369 = vmatpush.bf16.msra.mxu0 %v1207
      %1370 = vmatpush.bf16.msra.mxu0 %v1206
      %1371 = vmatpush.bf16.msra.mxu0 %v1205
      %1372 = vmatpush.bf16.msra.mxu0 %v1204
      %1373 = vmatpush.bf16.msra.mxu0 %v1203
      %1374 = vmatmul.bf16.gmra.mxu0 %v758
      %v1375 = vpop.f32.mrf.mxu0
      %v1376 = vadd.f32 %v1363, %v1375
      %v1377 = vpop.f32.mrf.mxu0
      %1378 = vdwg.mxu0
      %1379 = vst [vmem:[#allocation13] sm:$0xff] %v1376
    $region53: #{tpu_custom_call.1} parent=1 // pred_fallthru
      _
    // Predicated region
    $region54: #{tpu_custom_call.1} parent=1 // pred_check
      _
    $region55: #{tpu_custom_call.1} parent=1 // pred_check_branch
      %1381 = sbr.rel (0) target = $region57
    $region56: #{tpu_custom_call.1} parent=1 // pred_region
      %1383 = vsyncadd [#allocation6], 0
      %s1385 = sshll.u32 [#allocation13], 4
      %s1386 = int_to_ptr.vmem [resolvable:$true] %s1385
      %s1387 = sshll.u32 %s6, 4
      %s1388 = int_to_ptr.hbm [resolvable:$true] %s1387
      %1390 = dma.vmem_to_hbm [thread:$0]  %s1386, 128, %s1388, [#allocation6]
    $region57: #{tpu_custom_call.1} parent=1 // pred_fallthru
      _
    // Predicated region
    $region58: #{tpu_custom_call.1} parent=1 // pred_check
      _
    $region59: #{tpu_custom_call.1} parent=1 // pred_check_branch
      %1392 = sbr.rel (0) target = $region61
    $region60: #{tpu_custom_call.1} parent=1 // pred_region
      %1394 = dma.done [#allocation6], 128
    $region61: #{tpu_custom_call.1} parent=1 // pred_fallthru
      _
    %1395 = vsyncpa [#allocation5], 1
    %1396 = vsyncpa [#allocation8], 1
    %1397 = vsyncpa [#allocation11], 1
    %1398 = vsyncpa [#allocation6], 1

</llo_original>
